<compile_context>
chip_gen: v5e
topology: v5e:2x2
jax: 0.10.0
libtpu: 0.0.40
codegen_flags: <defaults>
</compile_context>

<pallas_src>
import functools

import jax
import jax.numpy as jnp
from jax.experimental import pallas as pl
from jax.experimental.pallas import tpu as pltpu

LANE = 128      # TPU vreg lane width: keep the channel axis lane-dense.
SUBLANE = 8


def _round_up(n, m):
    return ((n + m - 1) // m) * m


# ----------------------------------------------------------------------------
# Pallas kernel: conv1 -> BN -> ReLU -> conv2 -> BN -> ReLU -> (+res) -> ReLU
# ----------------------------------------------------------------------------
def _make_block_kernel(k, d, T, pa, bb, cin_p, cout_p, has_ds):
    """One TemporalBlock, one batch tile per grid step.

    Static closure args:
      k, d          : conv kernel size / dilation
      T             : (sublane-padded) sequence length
      pa            : left zero-pad, (k-1)*d rounded up to a sublane multiple
      bb            : batch rows per grid step (folded into the matmul M dim)
      cin_p, cout_p : lane-padded channel counts (multiples of 128)
      has_ds        : 1x1 downsample on the residual path (Cin != Cout)
    """
    e = pa - (k - 1) * d     # alignment-only extra zeros before the causal pad

    def kernel(xpad_ref, w1_ref, c1_ref, w2_ref, c2_ref, *rest):
        if has_ds:
            wd_ref, bd_ref, out_ref, hbuf_ref = rest
        else:
            out_ref, hbuf_ref = rest

        x = xpad_ref[...]                               # (bb, pa+T, cin_p) f32
        xb = x.astype(jnp.bfloat16)

        # ---- conv1: k dilated taps fused into one im2col bf16 MXU matmul ---
        slab1 = jnp.concatenate(
            [xb[:, e + j * d: e + j * d + T, :] for j in range(k)], axis=-1,
        ).reshape(bb * T, k * cin_p)
        h = jnp.dot(slab1, w1_ref[...], preferred_element_type=jnp.float32)
        h = jnp.maximum(h + c1_ref[...], 0.0)   # conv bias + eval-BN folded; ReLU
        # dropout1: identity (eval-mode forward)

        # ---- causal left-pad of h via persistent bf16 VMEM scratch ---------
        # Zeroing the pa history rows every step is a few KiB of stores and is
        # megacore-safe (each core owns its own scratch copy).
        if pa > 0:
            hbuf_ref[:, :pa, :] = jnp.zeros((bb, pa, cout_p), jnp.bfloat16)
        hbuf_ref[:, pa:, :] = h.reshape(bb, T, cout_p).astype(jnp.bfloat16)
        hp = hbuf_ref[...]                              # (bb, pa+T, cout_p) bf16

        # ---- conv2: same im2col bf16 MXU matmul -----------------------------
        slab2 = jnp.concatenate(
            [hp[:, e + j * d: e + j * d + T, :] for j in range(k)], axis=-1,
        ).reshape(bb * T, k * cout_p)
        h2 = jnp.dot(slab2, w2_ref[...], preferred_element_type=jnp.float32)
        h2 = jnp.maximum(h2 + c2_ref[...], 0.0)
        # dropout2: identity (eval-mode forward)

        # ---- residual (identity or folded 1x1 downsample) + final ReLU -----
        x0 = x[:, pa:pa + T, :].reshape(bb * T, cin_p)
        if has_ds:
            res = jnp.dot(x0.astype(jnp.bfloat16), wd_ref[...],
                          preferred_element_type=jnp.float32) + bd_ref[...]
        else:
            res = x0           # cin_p == cout_p here; padded lanes stay zero
        out_ref[...] = jnp.maximum(h2 + res, 0.0).reshape(bb, T, cout_p)

    return kernel


# ----------------------------------------------------------------------------
# Wrapper: layout plumbing + VMEM-budgeted tiling + pallas_call
# ----------------------------------------------------------------------------
@functools.partial(jax.jit,
                   static_argnames=("kernel_size", "dilation", "out_channels"))
def temporal_block_forward(x, kparams, *, kernel_size, dilation, out_channels):
    """x: (B, Cin, T) in PyTorch Conv1d layout.  Returns (B, Cout, T)."""
    B, Cin, T = x.shape
    k, d = kernel_size, dilation
    P = (k - 1) * d
    pa = _round_up(P, SUBLANE) if P > 0 else 0   # sublane-aligned causal pad
    T_p = _round_up(T, SUBLANE)                  # sublane-aligned sequence
    cin_p = _round_up(Cin, LANE)
    cout_p = _round_up(out_channels, LANE)
    has_ds = "wd" in kparams

    # ---- VMEM-budget-derived batch tile (generation-aware) -----------------
    try:
        vmem_cap = int(pltpu.get_tpu_info().vmem_capacity_bytes)
    except Exception:
        vmem_cap = 64 << 20                      # conservative (v7x per-TC)

    def step_vmem_bytes(bb):
        f32, bf16 = 4, 2
        xblk = bb * (pa + T_p) * cin_p * f32 * 2          # streamed in, 2-deep
        oblk = bb * T_p * cout_p * f32 * 2                # streamed out, 2-deep
        slabs = bb * T_p * k * (cin_p + cout_p) * bf16    # im2col temporaries
        hbuf = bb * (pa + T_p) * cout_p * bf16            # scratch
        acts = bb * T_p * cout_p * f32 * 3                # h / h2 / res temps
        wbytes = 2 * bf16 * (k * cin_p * cout_p + k * cout_p * cout_p
                             + (cin_p * cout_p if has_ds else 0))
        return xblk + oblk + slabs + hbuf + acts + wbytes + 2 * f32 * 3 * cout_p

    # Target a working set well under scoped VMEM (fits v7x 64 MiB too).
    budget = max(8 << 20, min(vmem_cap // 2 - (4 << 20), 24 << 20))
    const = step_vmem_bytes(0)
    per_row = step_vmem_bytes(1) - const
    bb_budget = max(1, (budget - const) // per_row)
    bb_cap = max(1, (B + 1) // 2)        # keep >= 2 grid steps when B >= 2
    bb = int(max(1, min(bb_budget, bb_cap, B)))

    B_pad = _round_up(B, bb)             # ragged batch: pad, don't shrink bb
    grid = (B_pad // bb,)

    # channels-last, lane-padded, sublane-padded, causally left-padded
    # NOTE: in a full TCN stack, keep this padded (B, T, c_p) layout between
    # blocks and do the NCW transpose / pad only at the network boundary.
    xt = jnp.transpose(x, (0, 2, 1))                              # (B, T, Cin)
    xpad = jnp.pad(xt, ((0, B_pad - B), (pa, T_p - T), (0, cin_p - Cin)))

    in_arrays = [xpad, kparams["w1"], kparams["c1"],
                 kparams["w2"], kparams["c2"]]
    in_specs = [
        pl.BlockSpec((bb, pa + T_p, cin_p), lambda i: (i, 0, 0)),
        pl.BlockSpec((k * cin_p, cout_p), lambda i: (0, 0)),
        pl.BlockSpec((1, cout_p), lambda i: (0, 0)),
        pl.BlockSpec((k * cout_p, cout_p), lambda i: (0, 0)),
        pl.BlockSpec((1, cout_p), lambda i: (0, 0)),
    ]
    if has_ds:
        in_arrays += [kparams["wd"], kparams["bd"]]
        in_specs += [
            pl.BlockSpec((cin_p, cout_p), lambda i: (0, 0)),
            pl.BlockSpec((1, cout_p), lambda i: (0, 0)),
        ]

    step_total = step_vmem_bytes(bb)
    vmem_limit = int(min(max(32 << 20, 2 * step_total), vmem_cap - (2 << 20)))

    kernel = _make_block_kernel(k, d, T_p, pa, bb, cin_p, cout_p, has_ds)
    y = pl.pallas_call(
        kernel,
        out_shape=jax.ShapeDtypeStruct((B_pad, T_p, cout_p), jnp.float32),
        grid=grid,
        in_specs=in_specs,
        out_specs=pl.BlockSpec((bb, T_p, cout_p), lambda i: (i, 0, 0)),
        scratch_shapes=[pltpu.VMEM((bb, pa + T_p, cout_p), jnp.bfloat16)],
        compiler_params=pltpu.CompilerParams(
            dimension_semantics=("parallel",),
            vmem_limit_bytes=vmem_limit),
    )(*in_arrays)

    # strip batch/time/lane padding, back to PyTorch (B, Cout, T) layout
    return jnp.transpose(y[:B, :T, :out_channels], (0, 2, 1))


# ----------------------------------------------------------------------------
# Parameter construction: PyTorch-shaped raw params -> folded, packed, padded
# ----------------------------------------------------------------------------
def init_raw_params(key, in_channels, out_channels, kernel_size):
    """Synthetic parameters matching the PyTorch module's shapes/init style."""
    ks = jax.random.split(key, 16)
    f1 = in_channels * kernel_size
    f2 = out_channels * kernel_size
    raw = {
        "conv1_w": jax.random.normal(
            ks[0], (out_channels, in_channels, kernel_size),
            jnp.float32) * (2.0 / f1) ** 0.5,                 # kaiming_normal_
        "conv1_b": 0.1 * jax.random.normal(ks[1], (out_channels,), jnp.float32),
        "conv2_w": jax.random.normal(
            ks[2], (out_channels, out_channels, kernel_size),
            jnp.float32) * (2.0 / f2) ** 0.5,
        "conv2_b": 0.1 * jax.random.normal(ks[3], (out_channels,), jnp.float32),
        "bn1": {
            "gamma": 1.0 + 0.1 * jax.random.normal(ks[4], (out_channels,), jnp.float32),
            "beta": 0.1 * jax.random.normal(ks[5], (out_channels,), jnp.float32),
            "mean": 0.1 * jax.random.normal(ks[6], (out_channels,), jnp.float32),
            "var": 0.5 + jax.random.uniform(ks[7], (out_channels,), jnp.float32),
        },
        "bn2": {
            "gamma": 1.0 + 0.1 * jax.random.normal(ks[8], (out_channels,), jnp.float32),
            "beta": 0.1 * jax.random.normal(ks[9], (out_channels,), jnp.float32),
            "mean": 0.1 * jax.random.normal(ks[10], (out_channels,), jnp.float32),
            "var": 0.5 + jax.random.uniform(ks[11], (out_channels,), jnp.float32),
        },
    }
    if in_channels != out_channels:
        raw["ds_w"] = jax.random.normal(
            ks[12], (out_channels, in_channels, 1),
            jnp.float32) * (2.0 / in_channels) ** 0.5
        raw["ds_b"] = 0.1 * jax.random.normal(ks[13], (out_channels,), jnp.float32)
    return raw


def _fold_bn(conv_w, conv_b, bn, eps):
    # Eval-mode BN folded into the conv:
    #   y = (conv(x)+b - mean)*gamma/sqrt(var+eps) + beta
    #     = conv(x)*s + c,   s = gamma/sqrt(var+eps),  c = (b-mean)*s + beta
    s = bn["gamma"] / jnp.sqrt(bn["var"] + eps)               # (Cout,)
    w_kio = jnp.transpose(conv_w, (2, 1, 0)) * s              # (K, Cin, Cout)
    c = (conv_b - bn["mean"]) * s + bn["beta"]                # (Cout,)
    return w_kio, c


def _pack_weight(w_kio, rows_p, cout_p):
    # Lane-pad each tap to (rows_p, cout_p), stack taps along the contraction
    # axis (matches the kernel's im2col column ordering), store as bf16.
    K, ci, co = w_kio.shape
    wp = jnp.zeros((K, rows_p, cout_p), jnp.float32).at[:, :ci, :co].set(w_kio)
    return wp.reshape(K * rows_p, cout_p).astype(jnp.bfloat16)


def _pad_row(v, cout_p):
    return jnp.zeros((1, cout_p), jnp.float32).at[0, :v.shape[0]].set(v)


def pack_params(raw, eps=1e-5):
    """Fold conv bias + eval-mode BN into weights; lane-pad; bf16 MXU weights."""
    co, ci, _k = raw["conv1_w"].shape
    cin_p, cout_p = _round_up(ci, LANE), _round_up(co, LANE)
    w1, c1 = _fold_bn(raw["conv1_w"], raw["conv1_b"], raw["bn1"], eps)
    w2, c2 = _fold_bn(raw["conv2_w"], raw["conv2_b"], raw["bn2"], eps)
    kp = {
        "w1": _pack_weight(w1, cin_p, cout_p), "c1": _pad_row(c1, cout_p),
        "w2": _pack_weight(w2, cout_p, cout_p), "c2": _pad_row(c2, cout_p),
    }
    if "ds_w" in raw:
        wd = jnp.transpose(raw["ds_w"][:, :, 0])              # (Cin, Cout)
        kp["wd"] = (jnp.zeros((cin_p, cout_p), jnp.float32)
                    .at[:ci, :co].set(wd).astype(jnp.bfloat16))
        kp["bd"] = _pad_row(raw["ds_b"], cout_p)
    return kp


# ----------------------------------------------------------------------------
# Pure-JAX reference (independent math path: lax.conv_general_dilated, f32)
# ----------------------------------------------------------------------------
def temporal_block_ref(x, raw, kernel_size, dilation, eps=1e-5):
    def causal_conv(inp, w, b, d):
        P = (w.shape[2] - 1) * d
        y = jax.lax.conv_general_dilated(
            inp, w, window_strides=(1,), padding=[(P, 0)],
            rhs_dilation=(d,), dimension_numbers=("NCH", "OIH", "NCH"),
            precision=jax.lax.Precision.HIGHEST)
        return y + b[None, :, None]

    def bn_eval(z, p):
        s = p["gamma"] / jnp.sqrt(p["var"] + eps)
        return (z - p["mean"][None, :, None]) * s[None, :, None] \
            + p["beta"][None, :, None]

    h = jnp.maximum(bn_eval(causal_conv(x, raw["conv1_w"], raw["conv1_b"],
                                        dilation), raw["bn1"]), 0.0)
    h = jnp.maximum(bn_eval(causal_conv(h, raw["conv2_w"], raw["conv2_b"],
                                        dilation), raw["bn2"]), 0.0)
    if "ds_w" in raw:
        res = causal_conv(x, raw["ds_w"], raw["ds_b"], 1)
    else:
        res = x
    return jnp.maximum(h + res, 0.0)


# ----------------------------------------------------------------------------
if __name__ == "__main__":
    B, Cin, T = 2, 4, 16
    Cout, K, D = 8, 3, 2          # kernel_size=3, dilation=2 -> causal pad 4

    key = jax.random.PRNGKey(0)
    kx, kp = jax.random.split(key)
    x = jax.random.normal(kx, (B, Cin, T), jnp.float32)   # PyTorch NCW layout

    raw = init_raw_params(kp, Cin, Cout, K)
    kparams = pack_params(raw)

    out = temporal_block_forward(x, kparams, kernel_size=K, dilation=D,
                                 out_channels=Cout)
    out = jax.block_until_ready(out)

    ref = temporal_block_ref(x, raw, K, D)
    assert out.shape == (B, Cout, T), out.shape
    max_err = float(jnp.max(jnp.abs(out - ref)))
    # tolerance accommodates bf16 MXU operands vs the f32 HIGHEST reference
    assert jnp.allclose(out, ref, atol=5e-2, rtol=5e-2), \
        f"mismatch vs reference (max abs err {max_err})"

    print("KERNEL_OK")
</pallas_src>

<mosaic_0001>
module attributes {stable_mosaic.version = 11 : i64} {
  func.func @kernel(%arg0: i32, %arg1: memref<1x24x128xf32, #tpu.memory_space<vmem>>, %arg2: memref<384x128xbf16, #tpu.memory_space<vmem>>, %arg3: memref<1x128xf32, #tpu.memory_space<vmem>>, %arg4: memref<384x128xbf16, #tpu.memory_space<vmem>>, %arg5: memref<1x128xf32, #tpu.memory_space<vmem>>, %arg6: memref<128x128xbf16, #tpu.memory_space<vmem>>, %arg7: memref<1x128xf32, #tpu.memory_space<vmem>>, %arg8: memref<1x16x128xf32, #tpu.memory_space<vmem>>, %arg9: memref<1x24x128xbf16, #tpu.memory_space<vmem>>) attributes {dimension_semantics = [#tpu.dimension_semantics<parallel>], iteration_bounds = array<i64: 2>, scalar_prefetch = 0 : i64, scratch_operands = 1 : i64, tpu.core_type = #tpu.core_type<tc>, window_params = [{transform_indices = @transform_0, window_bounds = array<i64: 1, 24, 128>}, {pipeline_mode = #tpu.pipeline_mode<synchronous>, transform_indices = @transform_1, window_bounds = array<i64: 384, 128>}, {pipeline_mode = #tpu.pipeline_mode<synchronous>, transform_indices = @transform_2, window_bounds = array<i64: 1, 128>}, {pipeline_mode = #tpu.pipeline_mode<synchronous>, transform_indices = @transform_3, window_bounds = array<i64: 384, 128>}, {pipeline_mode = #tpu.pipeline_mode<synchronous>, transform_indices = @transform_4, window_bounds = array<i64: 1, 128>}, {pipeline_mode = #tpu.pipeline_mode<synchronous>, transform_indices = @transform_5, window_bounds = array<i64: 128, 128>}, {pipeline_mode = #tpu.pipeline_mode<synchronous>, transform_indices = @transform_6, window_bounds = array<i64: 1, 128>}, {transform_indices = @transform_7, window_bounds = array<i64: 1, 16, 128>}]} {
    %c0 = arith.constant 0 : index
    %c0_0 = arith.constant 0 : index
    %c0_1 = arith.constant 0 : index
    %0 = vector.load %arg1[%c0, %c0_0, %c0_1] : memref<1x24x128xf32, #tpu.memory_space<vmem>>, vector<1x24x128xf32>
    %1 = arith.truncf %0 : vector<1x24x128xf32> to vector<1x24x128xbf16>
    %2 = vector.extract_strided_slice %1 {offsets = [0, 4, 0], sizes = [1, 16, 128], strides = [1, 1, 1]} : vector<1x24x128xbf16> to vector<1x16x128xbf16>
    %3 = vector.extract_strided_slice %1 {offsets = [0, 6, 0], sizes = [1, 16, 128], strides = [1, 1, 1]} : vector<1x24x128xbf16> to vector<1x16x128xbf16>
    %4 = vector.extract_strided_slice %1 {offsets = [0, 8, 0], sizes = [1, 16, 128], strides = [1, 1, 1]} : vector<1x24x128xbf16> to vector<1x16x128xbf16>
    %5 = tpu.concatenate %2, %3, %4 in 2 : vector<1x16x128xbf16>, vector<1x16x128xbf16>, vector<1x16x128xbf16> -> vector<1x16x384xbf16>
    %6 = vector.shape_cast %5 : vector<1x16x384xbf16> to vector<16x384xbf16>
    %c0_2 = arith.constant 0 : index
    %c0_3 = arith.constant 0 : index
    %7 = vector.load %arg2[%c0_2, %c0_3] : memref<384x128xbf16, #tpu.memory_space<vmem>>, vector<384x128xbf16>
    %cst = arith.constant dense<0.000000e+00> : vector<16x128xf32>
    %8 = tpu.matmul %6, %7, %cst {dimension_numbers = #tpu.dot_dimension_numbers<[1], [0], [0], [1], [0, 0, 1, 1], [], []>} : vector<16x384xbf16>, vector<384x128xbf16>, vector<16x128xf32> -> vector<16x128xf32>
    %c0_4 = arith.constant 0 : index
    %c0_5 = arith.constant 0 : index
    %9 = vector.load %arg3[%c0_4, %c0_5] : memref<1x128xf32, #tpu.memory_space<vmem>>, vector<1x128xf32>
    %10 = vector.broadcast %9 : vector<1x128xf32> to vector<16x128xf32>
    %11 = arith.addf %8, %10 : vector<16x128xf32>
    %cst_6 = arith.constant 0.000000e+00 : f32
    %12 = vector.broadcast %cst_6 : f32 to vector<16x128xf32>
    %13 = arith.maximumf %11, %12 : vector<16x128xf32>
    %cst_7 = arith.constant 0.000000e+00 : bf16
    %14 = vector.broadcast %cst_7 : bf16 to vector<1x8x128xbf16>
    %c0_8 = arith.constant 0 : index
    %c0_9 = arith.constant 0 : index
    %c0_10 = arith.constant 0 : index
    %15 = vector.load %arg9[%c0_8, %c0_9, %c0_10] : memref<1x24x128xbf16, #tpu.memory_space<vmem>>, vector<1x8x128xbf16>
    tpu.vector_store %arg9[%c0_8, %c0_9, %c0_10], %14 {strides = array<i32>} : memref<1x24x128xbf16, #tpu.memory_space<vmem>>, vector<1x8x128xbf16>,
    %16 = vector.shape_cast %13 : vector<16x128xf32> to vector<1x16x128xf32>
    %17 = arith.truncf %16 : vector<1x16x128xf32> to vector<1x16x128xbf16>
    %c0_11 = arith.constant 0 : index
    %c8 = arith.constant 8 : index
    %c0_12 = arith.constant 0 : index
    %18 = vector.load %arg9[%c0_11, %c8, %c0_12] : memref<1x24x128xbf16, #tpu.memory_space<vmem>>, vector<1x16x128xbf16>
    tpu.vector_store %arg9[%c0_11, %c8, %c0_12], %17 {strides = array<i32>} : memref<1x24x128xbf16, #tpu.memory_space<vmem>>, vector<1x16x128xbf16>,
    %c0_13 = arith.constant 0 : index
    %c0_14 = arith.constant 0 : index
    %c0_15 = arith.constant 0 : index
    %19 = vector.load %arg9[%c0_13, %c0_14, %c0_15] : memref<1x24x128xbf16, #tpu.memory_space<vmem>>, vector<1x24x128xbf16>
    %20 = vector.extract_strided_slice %19 {offsets = [0, 4, 0], sizes = [1, 16, 128], strides = [1, 1, 1]} : vector<1x24x128xbf16> to vector<1x16x128xbf16>
    %21 = vector.extract_strided_slice %19 {offsets = [0, 6, 0], sizes = [1, 16, 128], strides = [1, 1, 1]} : vector<1x24x128xbf16> to vector<1x16x128xbf16>
    %22 = vector.extract_strided_slice %19 {offsets = [0, 8, 0], sizes = [1, 16, 128], strides = [1, 1, 1]} : vector<1x24x128xbf16> to vector<1x16x128xbf16>
    %23 = tpu.concatenate %20, %21, %22 in 2 : vector<1x16x128xbf16>, vector<1x16x128xbf16>, vector<1x16x128xbf16> -> vector<1x16x384xbf16>
    %24 = vector.shape_cast %23 : vector<1x16x384xbf16> to vector<16x384xbf16>
    %c0_16 = arith.constant 0 : index
    %c0_17 = arith.constant 0 : index
    %25 = vector.load %arg4[%c0_16, %c0_17] : memref<384x128xbf16, #tpu.memory_space<vmem>>, vector<384x128xbf16>
    %cst_18 = arith.constant dense<0.000000e+00> : vector<16x128xf32>
    %26 = tpu.matmul %24, %25, %cst_18 {dimension_numbers = #tpu.dot_dimension_numbers<[1], [0], [0], [1], [0, 0, 1, 1], [], []>} : vector<16x384xbf16>, vector<384x128xbf16>, vector<16x128xf32> -> vector<16x128xf32>
    %c0_19 = arith.constant 0 : index
    %c0_20 = arith.constant 0 : index
    %27 = vector.load %arg5[%c0_19, %c0_20] : memref<1x128xf32, #tpu.memory_space<vmem>>, vector<1x128xf32>
    %28 = vector.broadcast %27 : vector<1x128xf32> to vector<16x128xf32>
    %29 = arith.addf %26, %28 : vector<16x128xf32>
    %cst_21 = arith.constant 0.000000e+00 : f32
    %30 = vector.broadcast %cst_21 : f32 to vector<16x128xf32>
    %31 = arith.maximumf %29, %30 : vector<16x128xf32>
    %32 = vector.extract_strided_slice %0 {offsets = [0, 8, 0], sizes = [1, 16, 128], strides = [1, 1, 1]} : vector<1x24x128xf32> to vector<1x16x128xf32>
    %33 = vector.shape_cast %32 : vector<1x16x128xf32> to vector<16x128xf32>
    %34 = arith.truncf %33 : vector<16x128xf32> to vector<16x128xbf16>
    %c0_22 = arith.constant 0 : index
    %c0_23 = arith.constant 0 : index
    %35 = vector.load %arg6[%c0_22, %c0_23] : memref<128x128xbf16, #tpu.memory_space<vmem>>, vector<128x128xbf16>
    %cst_24 = arith.constant dense<0.000000e+00> : vector<16x128xf32>
    %36 = tpu.matmul %34, %35, %cst_24 {dimension_numbers = #tpu.dot_dimension_numbers<[1], [0], [0], [1], [0, 0, 1, 1], [], []>} : vector<16x128xbf16>, vector<128x128xbf16>, vector<16x128xf32> -> vector<16x128xf32>
    %c0_25 = arith.constant 0 : index
    %c0_26 = arith.constant 0 : index
    %37 = vector.load %arg7[%c0_25, %c0_26] : memref<1x128xf32, #tpu.memory_space<vmem>>, vector<1x128xf32>
    %38 = vector.broadcast %37 : vector<1x128xf32> to vector<16x128xf32>
    %39 = arith.addf %36, %38 : vector<16x128xf32>
    %40 = arith.addf %31, %39 : vector<16x128xf32>
    %cst_27 = arith.constant 0.000000e+00 : f32
    %41 = vector.broadcast %cst_27 : f32 to vector<16x128xf32>
    %42 = arith.maximumf %40, %41 : vector<16x128xf32>
    %43 = vector.shape_cast %42 : vector<16x128xf32> to vector<1x16x128xf32>
    %c0_28 = arith.constant 0 : index
    %c0_29 = arith.constant 0 : index
    %c0_30 = arith.constant 0 : index
    %44 = vector.load %arg8[%c0_28, %c0_29, %c0_30] : memref<1x16x128xf32, #tpu.memory_space<vmem>>, vector<1x16x128xf32>
    tpu.vector_store %arg8[%c0_28, %c0_29, %c0_30], %43 {strides = array<i32>} : memref<1x16x128xf32, #tpu.memory_space<vmem>>, vector<1x16x128xf32>,
    return
  }
  func.func @transform_0(%arg0: i32) -> (i32, i32, i32) {
    %c0_i32 = arith.constant 0 : i32
    %c0_i32_0 = arith.constant 0 : i32
    %c0_i32_1 = arith.constant 0 : i32
    return %arg0, %c0_i32, %c0_i32_0 : i32, i32, i32
  }
  func.func @transform_1(%arg0: i32) -> (i32, i32) {
    %c0_i32 = arith.constant 0 : i32
    %c0_i32_0 = arith.constant 0 : i32
    %c0_i32_1 = arith.constant 0 : i32
    return %c0_i32, %c0_i32_0 : i32, i32
  }
  func.func @transform_2(%arg0: i32) -> (i32, i32) {
    %c0_i32 = arith.constant 0 : i32
    %c0_i32_0 = arith.constant 0 : i32
    %c0_i32_1 = arith.constant 0 : i32
    return %c0_i32, %c0_i32_0 : i32, i32
  }
  func.func @transform_3(%arg0: i32) -> (i32, i32) {
    %c0_i32 = arith.constant 0 : i32
    %c0_i32_0 = arith.constant 0 : i32
    %c0_i32_1 = arith.constant 0 : i32
    return %c0_i32, %c0_i32_0 : i32, i32
  }
  func.func @transform_4(%arg0: i32) -> (i32, i32) {
    %c0_i32 = arith.constant 0 : i32
    %c0_i32_0 = arith.constant 0 : i32
    %c0_i32_1 = arith.constant 0 : i32
    return %c0_i32, %c0_i32_0 : i32, i32
  }
  func.func @transform_5(%arg0: i32) -> (i32, i32) {
    %c0_i32 = arith.constant 0 : i32
    %c0_i32_0 = arith.constant 0 : i32
    %c0_i32_1 = arith.constant 0 : i32
    return %c0_i32, %c0_i32_0 : i32, i32
  }
  func.func @transform_6(%arg0: i32) -> (i32, i32) {
    %c0_i32 = arith.constant 0 : i32
    %c0_i32_0 = arith.constant 0 : i32
    %c0_i32_1 = arith.constant 0 : i32
    return %c0_i32, %c0_i32_0 : i32, i32
  }
  func.func @transform_7(%arg0: i32) -> (i32, i32, i32) {
    %c0_i32 = arith.constant 0 : i32
    %c0_i32_0 = arith.constant 0 : i32
    %c0_i32_1 = arith.constant 0 : i32
    return %arg0, %c0_i32, %c0_i32_0 : i32, i32, i32
  }
}

</mosaic_0001>

<llo_original>
// kernel: temporal_block_forward.1
$region0: #{temporal_block_forward.1}
  #allocation0 [shape = 'u32[]', space=smem, size = 0x4, offset = 0x4, fixed_abs, tag = 'smem constant byte address 0x4 - core index']
  #allocation1 [shape = 'u32[72,128]{1,0:T(1,128)}', space=vmem, size = 0x9000, scoped, tag = 'internal scratch']
  #allocation2 [shape = 'bf16[1,24,128]{2,1,0:T(8,128)(2,1)}', space=vmem, size = 0x1800, scoped, tag = 'scratch operand']
  %s0 = inlined_call_operand.vmem [shape: f32[2,24,128], index: 0, kind: input, shape index: {}]
  %s1 = inlined_call_operand.hbm [shape: bf16[384,128], index: 1, kind: input, shape index: {}]
  %s2 = inlined_call_operand.vmem [shape: f32[1,128], index: 2, kind: input, shape index: {}]
  %s3 = inlined_call_operand.hbm [shape: bf16[384,128], index: 3, kind: input, shape index: {}]
  %s4 = inlined_call_operand.vmem [shape: f32[1,128], index: 4, kind: input, shape index: {}]
  %s5 = inlined_call_operand.vmem [shape: bf16[128,128], index: 5, kind: input, shape index: {}]
  %s6 = inlined_call_operand.vmem [shape: f32[1,128], index: 6, kind: input, shape index: {}]
  %s7 = inlined_call_operand.vmem [shape: f32[2,16,128], index: 7, kind: output, shape index: {}]
  %s8 = sld [smem:[#allocation0]]
  $region69: #{temporal_block_forward.1} parent=0
    _
  %s10 = ssub.s32 1, %s8
  %s11 = scalar_select 0, %s10, %s8
  $region1: #{temporal_block_forward.1} parent=0
    #allocation3 [shape = 'u8[98304]{0}', space=vmem, size = 0x18000, scoped, tag = 'input window, operand 1, single buffered']
    #allocation4 [shape = 's32[2]{0}', space=sflag, size = 0x8, scoped, tag = 'scoped memory for temporal_block_forward.1']
    #allocation5 [shape = 'u8[98304]{0}', space=vmem, size = 0x18000, scoped, tag = 'input window, operand 3, single buffered']
    #allocation6 [shape = 's32[1]{0}', space=sflag, size = 0x4, scoped, tag = 'scoped memory for temporal_block_forward.1']
    %12 = vsyncpa [#allocation4], 0
    %13 = vsyncpa [#allocation6], 0
    loop: start=0, step=1, limit=4
    $region2: #{temporal_block_forward.1} parent=1 // loop_pre_header
      _
    $region3: #{temporal_block_forward.1} parent=1 // loop_header
      %s15 = sphi 0, %s19
      %p16 = scmp.ge.s32.totalorder %s15, 4
      %s25 = sphi 0, %s27
      %s28 = sphi 0, %s25
      %s29 = sphi 0, %s28
      %s45 = sphi 0, %s29
      %s49 = sphi 0, %s49
      %s51 = sphi 0, %s49
      %s52 = sphi 0, %s51
      %s66 = sphi 0, %s52
      %s70 = sphi 0, %s70
      %s72 = sphi 0, %s70
      %s73 = sphi 0, %s72
      %s87 = sphi 0, %s73
      %s91 = sphi 0, %s91
      %s93 = sphi 0, %s91
      %s94 = sphi 0, %s93
      %s108 = sphi 0, %s94
      %s112 = sphi 0, %s112
      %s114 = sphi 0, %s112
      %s115 = sphi 0, %s114
      %s129 = sphi 0, %s115
      %s133 = sphi 0, %s133
      %s135 = sphi 0, %s133
      %s136 = sphi 0, %s135
      %s150 = sphi 0, %s136
      %s154 = sphi 0, %s154
      %s156 = sphi 0, %s154
      %s157 = sphi 0, %s156
      %s171 = sphi 0, %s157
      %s177 = sphi 0, %s179
      %s180 = sphi 0, %s177
      %s181 = sphi 0, %s180
      %s197 = sphi 0, %s181
    $region4: #{temporal_block_forward.1} parent=1 // loop_header_branch
      %18 = sbr.rel (%p16) target = $region8
    $region5: #{temporal_block_forward.1} parent=1 // loop_body
      %s20 = ssub.s32 %s15, 1
      %s21 = ssub.s32 %s15, 2
      %s22 = sadd.s32 %s15, 1
      %s23 = ssub.s32 %s15, %s22
      %p24 = scmp.eq.s32.totalorder %s23, 0
      %s26 = sadd.s32 %s25, 1
      %s27 = scalar_select %p24, %s25, %s26
      %p30 = pneg %p24
      %p31 = scmp.eq.s32.totalorder %s15, 1
      %p32 = por %p30, %p31
      %p33 = scmp.ne.s32.totalorder %s25, %s28
      %p34 = scmp.eq.s32.totalorder %s15, 0
      %p35 = por %p33, %p34
      %p36 = scmp.ne.s32.totalorder %s25, %s28
      %p37 = scmp.eq.s32.totalorder %s20, 1
      %p38 = por %p36, %p37
      %p39 = scmp.ne.s32.totalorder %s28, %s29
      %p40 = scmp.eq.s32.totalorder %s20, 0
      %p41 = por %p39, %p40
      %p42 = scmp.ne.s32.totalorder %s28, %s29
      %p43 = scmp.eq.s32.totalorder %s21, 1
      %p44 = por %p42, %p43
      %p46 = scmp.ne.s32.totalorder %s29, %s45
      %p47 = scmp.eq.s32.totalorder %s21, 0
      %p48 = por %p46, %p47
      %s50 = sadd.s32 %s49, 1
      %p53 = scmp.eq.s32.totalorder %s15, 1
      %p54 = scmp.ne.s32.totalorder %s49, %s51
      %p55 = scmp.eq.s32.totalorder %s15, 0
      %p56 = por %p54, %p55
      %p57 = scmp.ne.s32.totalorder %s49, %s51
      %p58 = scmp.eq.s32.totalorder %s20, 1
      %p59 = por %p57, %p58
      %p60 = scmp.ne.s32.totalorder %s51, %s52
      %p61 = scmp.eq.s32.totalorder %s20, 0
      %p62 = por %p60, %p61
      %p63 = scmp.ne.s32.totalorder %s51, %s52
      %p64 = scmp.eq.s32.totalorder %s21, 1
      %p65 = por %p63, %p64
      %p67 = scmp.ne.s32.totalorder %s52, %s66
      %p68 = scmp.eq.s32.totalorder %s21, 0
      %p69 = por %p67, %p68
      %s71 = sadd.s32 %s70, 1
      %p74 = scmp.eq.s32.totalorder %s15, 1
      %p75 = scmp.ne.s32.totalorder %s70, %s72
      %p76 = scmp.eq.s32.totalorder %s15, 0
      %p77 = por %p75, %p76
      %p78 = scmp.ne.s32.totalorder %s70, %s72
      %p79 = scmp.eq.s32.totalorder %s20, 1
      %p80 = por %p78, %p79
      %p81 = scmp.ne.s32.totalorder %s72, %s73
      %p82 = scmp.eq.s32.totalorder %s20, 0
      %p83 = por %p81, %p82
      %p84 = scmp.ne.s32.totalorder %s72, %s73
      %p85 = scmp.eq.s32.totalorder %s21, 1
      %p86 = por %p84, %p85
      %p88 = scmp.ne.s32.totalorder %s73, %s87
      %p89 = scmp.eq.s32.totalorder %s21, 0
      %p90 = por %p88, %p89
      %s92 = sadd.s32 %s91, 1
      %p95 = scmp.eq.s32.totalorder %s15, 1
      %p96 = scmp.ne.s32.totalorder %s91, %s93
      %p97 = scmp.eq.s32.totalorder %s15, 0
      %p98 = por %p96, %p97
      %p99 = scmp.ne.s32.totalorder %s91, %s93
      %p100 = scmp.eq.s32.totalorder %s20, 1
      %p101 = por %p99, %p100
      %p102 = scmp.ne.s32.totalorder %s93, %s94
      %p103 = scmp.eq.s32.totalorder %s20, 0
      %p104 = por %p102, %p103
      %p105 = scmp.ne.s32.totalorder %s93, %s94
      %p106 = scmp.eq.s32.totalorder %s21, 1
      %p107 = por %p105, %p106
      %p109 = scmp.ne.s32.totalorder %s94, %s108
      %p110 = scmp.eq.s32.totalorder %s21, 0
      %p111 = por %p109, %p110
      %s113 = sadd.s32 %s112, 1
      %p116 = scmp.eq.s32.totalorder %s15, 1
      %p117 = scmp.ne.s32.totalorder %s112, %s114
      %p118 = scmp.eq.s32.totalorder %s15, 0
      %p119 = por %p117, %p118
      %p120 = scmp.ne.s32.totalorder %s112, %s114
      %p121 = scmp.eq.s32.totalorder %s20, 1
      %p122 = por %p120, %p121
      %p123 = scmp.ne.s32.totalorder %s114, %s115
      %p124 = scmp.eq.s32.totalorder %s20, 0
      %p125 = por %p123, %p124
      %p126 = scmp.ne.s32.totalorder %s114, %s115
      %p127 = scmp.eq.s32.totalorder %s21, 1
      %p128 = por %p126, %p127
      %p130 = scmp.ne.s32.totalorder %s115, %s129
      %p131 = scmp.eq.s32.totalorder %s21, 0
      %p132 = por %p130, %p131
      %s134 = sadd.s32 %s133, 1
      %p137 = scmp.eq.s32.totalorder %s15, 1
      %p138 = scmp.ne.s32.totalorder %s133, %s135
      %p139 = scmp.eq.s32.totalorder %s15, 0
      %p140 = por %p138, %p139
      %p141 = scmp.ne.s32.totalorder %s133, %s135
      %p142 = scmp.eq.s32.totalorder %s20, 1
      %p143 = por %p141, %p142
      %p144 = scmp.ne.s32.totalorder %s135, %s136
      %p145 = scmp.eq.s32.totalorder %s20, 0
      %p146 = por %p144, %p145
      %p147 = scmp.ne.s32.totalorder %s135, %s136
      %p148 = scmp.eq.s32.totalorder %s21, 1
      %p149 = por %p147, %p148
      %p151 = scmp.ne.s32.totalorder %s136, %s150
      %p152 = scmp.eq.s32.totalorder %s21, 0
      %p153 = por %p151, %p152
      %s155 = sadd.s32 %s154, 1
      %p158 = scmp.eq.s32.totalorder %s15, 1
      %p159 = scmp.ne.s32.totalorder %s154, %s156
      %p160 = scmp.eq.s32.totalorder %s15, 0
      %p161 = por %p159, %p160
      %p162 = scmp.ne.s32.totalorder %s154, %s156
      %p163 = scmp.eq.s32.totalorder %s20, 1
      %p164 = por %p162, %p163
      %p165 = scmp.ne.s32.totalorder %s156, %s157
      %p166 = scmp.eq.s32.totalorder %s20, 0
      %p167 = por %p165, %p166
      %p168 = scmp.ne.s32.totalorder %s156, %s157
      %p169 = scmp.eq.s32.totalorder %s21, 1
      %p170 = por %p168, %p169
      %p172 = scmp.ne.s32.totalorder %s157, %s171
      %p173 = scmp.eq.s32.totalorder %s21, 0
      %p174 = por %p172, %p173
      %s175 = ssub.s32 %s15, %s22
      %p176 = scmp.eq.s32.totalorder %s175, 0
      %s178 = sadd.s32 %s177, 1
      %s179 = scalar_select %p176, %s177, %s178
      %p182 = pneg %p176
      %p183 = scmp.eq.s32.totalorder %s15, 1
      %p184 = por %p182, %p183
      %p185 = scmp.ne.s32.totalorder %s177, %s180
      %p186 = scmp.eq.s32.totalorder %s15, 0
      %p187 = por %p185, %p186
      %p188 = scmp.ne.s32.totalorder %s177, %s180
      %p189 = scmp.eq.s32.totalorder %s20, 1
      %p190 = por %p188, %p189
      %p191 = scmp.ne.s32.totalorder %s180, %s181
      %p192 = scmp.eq.s32.totalorder %s20, 0
      %p193 = por %p191, %p192
      %p194 = scmp.ne.s32.totalorder %s180, %s181
      %p195 = scmp.eq.s32.totalorder %s21, 1
      %p196 = por %p194, %p195
      %p198 = scmp.ne.s32.totalorder %s181, %s197
      %p199 = scmp.eq.s32.totalorder %s21, 0
      %p200 = por %p198, %p199
      %p201 = scmp.le.s32.totalorder 1, %s15
      %p202 = scmp.lt.s32.totalorder %s15, 3
      %p203 = pnand %p201, %p202
      %p204 = pneg %p203
      // Predicated region
      $region9: #{temporal_block_forward.1} parent=5 // pred_check
        _
      $region10: #{temporal_block_forward.1} parent=5 // pred_check_branch
        %206 = sbr.rel (%p203) target = $region12
      $region11: #{temporal_block_forward.1} parent=5 // pred_region
        %s207 = ssub.s32 %s15, 1
        // Predicated region
        $region13: #{temporal_block_forward.1} parent=11 // pred_check
          %p208 = pneg %p62
        $region14: #{temporal_block_forward.1} parent=11 // pred_check_branch
          %210 = sbr.rel (%p208) target = $region16
        $region15: #{temporal_block_forward.1} parent=11 // pred_region
          %212 = vsyncadd [#allocation4], 0
          %s213 = sshll.u32 %s1, 4
          %s214 = int_to_ptr.hbm [resolvable:$true] %s213
          %s215 = sshll.u32 [#allocation3], 4
          %s216 = int_to_ptr.vmem [resolvable:$true] %s215
          %221 = dma.hbm_to_vmem [thread:$0]  %s214, 3072, %s216, [#allocation4], 64, 64, 4
        $region16: #{temporal_block_forward.1} parent=11 // pred_fallthru
          _
        // Predicated region
        $region17: #{temporal_block_forward.1} parent=11 // pred_check
          %p222 = pneg %p83
        $region18: #{temporal_block_forward.1} parent=11 // pred_check_branch
          %224 = sbr.rel (%p222) target = $region20
        $region19: #{temporal_block_forward.1} parent=11 // pred_region
          _
        $region20: #{temporal_block_forward.1} parent=11 // pred_fallthru
          _
        // Predicated region
        $region21: #{temporal_block_forward.1} parent=11 // pred_check
          %p225 = pneg %p104
        $region22: #{temporal_block_forward.1} parent=11 // pred_check_branch
          %227 = sbr.rel (%p225) target = $region24
        $region23: #{temporal_block_forward.1} parent=11 // pred_region
          %229 = vsyncadd [#allocation6], 0
          %s230 = sshll.u32 %s3, 4
          %s231 = int_to_ptr.hbm [resolvable:$true] %s230
          %s232 = sshll.u32 [#allocation5], 4
          %s233 = int_to_ptr.vmem [resolvable:$true] %s232
          %238 = dma.hbm_to_vmem [thread:$0]  %s231, 3072, %s233, [#allocation6], 64, 64, 4
        $region24: #{temporal_block_forward.1} parent=11 // pred_fallthru
          _
        // Predicated region
        $region25: #{temporal_block_forward.1} parent=11 // pred_check
          %p239 = pneg %p125
        $region26: #{temporal_block_forward.1} parent=11 // pred_check_branch
          %241 = sbr.rel (%p239) target = $region28
        $region27: #{temporal_block_forward.1} parent=11 // pred_region
          _
        $region28: #{temporal_block_forward.1} parent=11 // pred_fallthru
          _
        // Predicated region
        $region29: #{temporal_block_forward.1} parent=11 // pred_check
          %p242 = pneg %p146
        $region30: #{temporal_block_forward.1} parent=11 // pred_check_branch
          %244 = sbr.rel (%p242) target = $region32
        $region31: #{temporal_block_forward.1} parent=11 // pred_region
          _
        $region32: #{temporal_block_forward.1} parent=11 // pred_fallthru
          _
        // Predicated region
        $region33: #{temporal_block_forward.1} parent=11 // pred_check
          %p245 = pneg %p167
        $region34: #{temporal_block_forward.1} parent=11 // pred_check_branch
          %247 = sbr.rel (%p245) target = $region36
        $region35: #{temporal_block_forward.1} parent=11 // pred_region
          _
        $region36: #{temporal_block_forward.1} parent=11 // pred_fallthru
          _
      $region12: #{temporal_block_forward.1} parent=5 // pred_fallthru
        _
      %p248 = scmp.lt.s32.totalorder %s15, 2
      // Predicated region
      $region37: #{temporal_block_forward.1} parent=5 // pred_check
        %p249 = pneg %p248
      $region38: #{temporal_block_forward.1} parent=5 // pred_check_branch
        %251 = sbr.rel (%p249) target = $region40
      $region39: #{temporal_block_forward.1} parent=5 // pred_region
        // Predicated region
        $region41: #{temporal_block_forward.1} parent=39 // pred_check
          %p252 = pneg %p35
        $region42: #{temporal_block_forward.1} parent=39 // pred_check_branch
          %254 = sbr.rel (%p252) target = $region44
        $region43: #{temporal_block_forward.1} parent=39 // pred_region
          %p255 = scmp.lt.s32.totalorder %s15, 1
          %s256 = scalar_select %p255, %s15, 1
          %s257 = smul.addr %s256, 3
          %s258 = smul.addr %s257, 8
          %s259 = scalar_lea.vmem %s0, %s258
        $region44: #{temporal_block_forward.1} parent=39 // pred_fallthru
          _
      $region40: #{temporal_block_forward.1} parent=5 // pred_fallthru
        _
      %p260 = scmp.le.s32.totalorder 1, %s15
      %p261 = scmp.lt.s32.totalorder %s15, 3
      %p262 = pnand %p260, %p261
      %p263 = pneg %p262
      // Predicated region
      $region45: #{temporal_block_forward.1} parent=5 // pred_check
        _
      $region46: #{temporal_block_forward.1} parent=5 // pred_check_branch
        %265 = sbr.rel (%p262) target = $region48
      $region47: #{temporal_block_forward.1} parent=5 // pred_region
        %s266 = ssub.s32 %s15, 1
        // Predicated region
        $region49: #{temporal_block_forward.1} parent=47 // pred_check
          %p267 = pneg %p62
        $region50: #{temporal_block_forward.1} parent=47 // pred_check_branch
          %269 = sbr.rel (%p267) target = $region52
        $region51: #{temporal_block_forward.1} parent=47 // pred_region
          %271 = dma.done [#allocation4], 3072
        $region52: #{temporal_block_forward.1} parent=47 // pred_fallthru
          _
        // Predicated region
        $region53: #{temporal_block_forward.1} parent=47 // pred_check
          %p272 = pneg %p104
        $region54: #{temporal_block_forward.1} parent=47 // pred_check_branch
          %274 = sbr.rel (%p272) target = $region56
        $region55: #{temporal_block_forward.1} parent=47 // pred_region
          %276 = dma.done [#allocation6], 3072
        $region56: #{temporal_block_forward.1} parent=47 // pred_fallthru
          _
        %p277 = scmp.lt.s32.totalorder %s20, 1
        %s278 = scalar_select %p277, %s20, 1
        %s279 = smul.addr %s278, 3
        %s280 = smul.addr %s279, 8
        %s281 = scalar_lea.vmem %s0, %s280
        %p282 = pneg %p41
        %p283 = pneg %p38
        %p284 = pneg %p62
        %p285 = pneg %p59
        %p286 = pneg %p83
        %p287 = pneg %p80
        %p288 = pneg %p104
        %p289 = pneg %p101
        %p290 = pneg %p125
        %p291 = pneg %p122
        %p292 = pneg %p146
        %p293 = pneg %p143
        %p294 = pneg %p167
        %p295 = pneg %p164
        %p296 = pneg %p193
        %p297 = pneg %p190
        %p298 = scmp.lt.s32.totalorder %s20, 1
        %s299 = scalar_select %p298, %s20, 1
        %s300 = smul.addr %s299, 2
        %s301 = smul.addr %s300, 8
        %s302 = scalar_lea.vmem %s7, %s301
        %p303 = scmp.lt.s32.totalorder %s20, 1
        %s304 = scalar_select %p303, %s20, 1
        %s305 = smul.addr %s304, 3
        %s306 = smul.addr %s305, 8
        %s307 = scalar_lea.vmem %s0, %s306
        %p308 = scmp.lt.s32.totalorder %s20, 1
        %s309 = scalar_select %p308, %s20, 1
        %s310 = smul.addr %s309, 2
        %s311 = smul.addr %s310, 8
        %s312 = scalar_lea.vmem %s7, %s311
        %v314 = vld [vmem:[%s307] sm:$0xff]
        %v315 = vld [vmem:[%s307 + $0x8] sm:$0xff]
        %v316 = vld [vmem:[%s307 + $0x10] sm:$0xff]
        %v317 = vpack.c.bf16 %v314, %v314
        %v318 = vpack.c.bf16 %v315, %v315
        %v319 = vpack.c.bf16 %v316, %v316
        %v323 = vunpack.c.l.b16 %v317
        %v324 = vunpack.c.l.b16 %v318
        %v325 = vunpack.c.l.b16 %v319
        %v326 = vpack.c.b16 %v324, %v323
        %v327 = vpack.c.b16 %v325, %v325
        %vm328 = vcmask 1046528
        %v329 = vrot.slane %v326, 1
        %v330 = vrot.slane %v327, 1
        %v331 = vsel %vm328, %v329, %v330
        %v332 = vpack.c.b16 %v325, %v324
        %v333 = vrot.slane %v332, 6
        %v334 = vld [vmem:[#allocation3] sm:$0xf]
        %v335 = vld [vmem:[#allocation3 + $0x4] sm:$0xf]
        %v336 = vld [vmem:[#allocation3 + $0x8] sm:$0xf]
        %v337 = vld [vmem:[#allocation3 + $0xc] sm:$0xf]
        %v338 = vld [vmem:[#allocation3 + $0x10] sm:$0xf]
        %v339 = vld [vmem:[#allocation3 + $0x14] sm:$0xf]
        %v340 = vld [vmem:[#allocation3 + $0x18] sm:$0xf]
        %v341 = vld [vmem:[#allocation3 + $0x1c] sm:$0xf]
        %v342 = vld [vmem:[#allocation3 + $0x20] sm:$0xf]
        %v343 = vld [vmem:[#allocation3 + $0x24] sm:$0xf]
        %v344 = vld [vmem:[#allocation3 + $0x28] sm:$0xf]
        %v345 = vld [vmem:[#allocation3 + $0x2c] sm:$0xf]
        %v346 = vld [vmem:[#allocation3 + $0x30] sm:$0xf]
        %v347 = vld [vmem:[#allocation3 + $0x34] sm:$0xf]
        %v348 = vld [vmem:[#allocation3 + $0x38] sm:$0xf]
        %v349 = vld [vmem:[#allocation3 + $0x3c] sm:$0xf]
        %v350 = vld [vmem:[#allocation3 + $0x40] sm:$0xf]
        %v351 = vld [vmem:[#allocation3 + $0x44] sm:$0xf]
        %v352 = vld [vmem:[#allocation3 + $0x48] sm:$0xf]
        %v353 = vld [vmem:[#allocation3 + $0x4c] sm:$0xf]
        %v354 = vld [vmem:[#allocation3 + $0x50] sm:$0xf]
        %v355 = vld [vmem:[#allocation3 + $0x54] sm:$0xf]
        %v356 = vld [vmem:[#allocation3 + $0x58] sm:$0xf]
        %v357 = vld [vmem:[#allocation3 + $0x5c] sm:$0xf]
        %v358 = vld [vmem:[#allocation3 + $0x60] sm:$0xf]
        %v359 = vld [vmem:[#allocation3 + $0x64] sm:$0xf]
        %v360 = vld [vmem:[#allocation3 + $0x68] sm:$0xf]
        %v361 = vld [vmem:[#allocation3 + $0x6c] sm:$0xf]
        %v362 = vld [vmem:[#allocation3 + $0x70] sm:$0xf]
        %v363 = vld [vmem:[#allocation3 + $0x74] sm:$0xf]
        %v364 = vld [vmem:[#allocation3 + $0x78] sm:$0xf]
        %v365 = vld [vmem:[#allocation3 + $0x7c] sm:$0xf]
        %v366 = vld [vmem:[#allocation3 + $0x80] sm:$0xf]
        %v367 = vld [vmem:[#allocation3 + $0x84] sm:$0xf]
        %v368 = vld [vmem:[#allocation3 + $0x88] sm:$0xf]
        %v369 = vld [vmem:[#allocation3 + $0x8c] sm:$0xf]
        %v370 = vld [vmem:[#allocation3 + $0x90] sm:$0xf]
        %v371 = vld [vmem:[#allocation3 + $0x94] sm:$0xf]
        %v372 = vld [vmem:[#allocation3 + $0x98] sm:$0xf]
        %v373 = vld [vmem:[#allocation3 + $0x9c] sm:$0xf]
        %v374 = vld [vmem:[#allocation3 + $0xa0] sm:$0xf]
        %v375 = vld [vmem:[#allocation3 + $0xa4] sm:$0xf]
        %v376 = vld [vmem:[#allocation3 + $0xa8] sm:$0xf]
        %v377 = vld [vmem:[#allocation3 + $0xac] sm:$0xf]
        %v378 = vld [vmem:[#allocation3 + $0xb0] sm:$0xf]
        %v379 = vld [vmem:[#allocation3 + $0xb4] sm:$0xf]
        %v380 = vld [vmem:[#allocation3 + $0xb8] sm:$0xf]
        %v381 = vld [vmem:[#allocation3 + $0xbc] sm:$0xf]
        %v382 = vld [vmem:[%s2] sm:$0x1]
        %v384 = vperm.slane %v382, 0
        %vm386 = vcmask 1045504
        %v387 = vrot.slane %v326, 2
        %v388 = vrot.slane %v327, 2
        %v389 = vsel %vm386, %v387, %v388
        %v390 = vrot.slane %v331, 2
        %v391 = vrot.slane %v330, 2
        %v392 = vsel %vm386, %v390, %v391
        %v393 = vrot.slane %v333, 2
        %v394 = vsel %vm386, %v393, %v393
        %v446 = vunpack.c.l.b16 %v334
        %v447 = vunpack.c.l.b16 %v335
        %v448 = vunpack.c.l.b16 %v336
        %v449 = vunpack.c.l.b16 %v337
        %v450 = vunpack.c.l.b16 %v338
        %v451 = vunpack.c.l.b16 %v339
        %v452 = vunpack.c.l.b16 %v340
        %v453 = vunpack.c.l.b16 %v341
        %v454 = vunpack.c.l.b16 %v342
        %v455 = vunpack.c.l.b16 %v343
        %v456 = vunpack.c.l.b16 %v344
        %v457 = vunpack.c.l.b16 %v345
        %v458 = vunpack.c.l.b16 %v346
        %v459 = vunpack.c.l.b16 %v347
        %v460 = vunpack.c.l.b16 %v348
        %v461 = vunpack.c.l.b16 %v349
        %v462 = vunpack.c.l.b16 %v350
        %v463 = vunpack.c.l.b16 %v351
        %v464 = vunpack.c.l.b16 %v352
        %v465 = vunpack.c.l.b16 %v353
        %v466 = vunpack.c.l.b16 %v354
        %v467 = vunpack.c.l.b16 %v355
        %v468 = vunpack.c.l.b16 %v356
        %v469 = vunpack.c.l.b16 %v357
        %v470 = vunpack.c.l.b16 %v358
        %v471 = vunpack.c.l.b16 %v359
        %v472 = vunpack.c.l.b16 %v360
        %v473 = vunpack.c.l.b16 %v361
        %v474 = vunpack.c.l.b16 %v362
        %v475 = vunpack.c.l.b16 %v363
        %v476 = vunpack.c.l.b16 %v364
        %v477 = vunpack.c.l.b16 %v365
        %v478 = vunpack.c.l.b16 %v366
        %v479 = vunpack.c.l.b16 %v367
        %v480 = vunpack.c.l.b16 %v368
        %v481 = vunpack.c.l.b16 %v369
        %v482 = vunpack.c.l.b16 %v370
        %v483 = vunpack.c.l.b16 %v371
        %v484 = vunpack.c.l.b16 %v372
        %v485 = vunpack.c.l.b16 %v373
        %v486 = vunpack.c.l.b16 %v374
        %v487 = vunpack.c.l.b16 %v375
        %v488 = vunpack.c.l.b16 %v376
        %v489 = vunpack.c.l.b16 %v377
        %v490 = vunpack.c.l.b16 %v378
        %v491 = vunpack.c.l.b16 %v379
        %v492 = vunpack.c.l.b16 %v380
        %v493 = vunpack.c.l.b16 %v381
        %v494 = vpack.c.b16 %v447, %v446
        %v495 = vpack.c.b16 %v449, %v448
        %v496 = vpack.c.b16 %v451, %v450
        %v497 = vpack.c.b16 %v453, %v452
        %v498 = vpack.c.b16 %v455, %v454
        %v499 = vpack.c.b16 %v457, %v456
        %v500 = vpack.c.b16 %v459, %v458
        %v501 = vpack.c.b16 %v461, %v460
        %v502 = vpack.c.b16 %v463, %v462
        %v503 = vpack.c.b16 %v465, %v464
        %v504 = vpack.c.b16 %v467, %v466
        %v505 = vpack.c.b16 %v469, %v468
        %v506 = vpack.c.b16 %v471, %v470
        %v507 = vpack.c.b16 %v473, %v472
        %v508 = vpack.c.b16 %v475, %v474
        %v509 = vpack.c.b16 %v477, %v476
        %v510 = vpack.c.b16 %v479, %v478
        %v511 = vpack.c.b16 %v481, %v480
        %v512 = vpack.c.b16 %v483, %v482
        %v513 = vpack.c.b16 %v485, %v484
        %v514 = vpack.c.b16 %v487, %v486
        %v515 = vpack.c.b16 %v489, %v488
        %v516 = vpack.c.b16 %v491, %v490
        %v517 = vpack.c.b16 %v493, %v492
        %542 = vmatpush.bf16.msra.mxu0 %v501
        %543 = vmatpush.bf16.msra.mxu0 %v500
        %544 = vmatpush.bf16.msra.mxu0 %v499
        %545 = vmatpush.bf16.msra.mxu0 %v498
        %546 = vmatpush.bf16.msra.mxu0 %v497
        %547 = vmatpush.bf16.msra.mxu0 %v496
        %548 = vmatpush.bf16.msra.mxu0 %v495
        %549 = vmatpush.bf16.msra.mxu0 %v494
        %550 = vmatmul.bf16.gmra.mxu0 %v389
        %v551 = vpop.f32.mrf.mxu0
        %v552 = vadd.f32 %v384, %v551
        %v553 = vpop.f32.mrf.mxu0
        %v554 = vadd.f32 %v384, %v553
        %555 = vdwg.mxu0
        %556 = vmatpush.bf16.msra.mxu0 %v509
        %557 = vmatpush.bf16.msra.mxu0 %v508
        %558 = vmatpush.bf16.msra.mxu0 %v507
        %559 = vmatpush.bf16.msra.mxu0 %v506
        %560 = vmatpush.bf16.msra.mxu0 %v505
        %561 = vmatpush.bf16.msra.mxu0 %v504
        %562 = vmatpush.bf16.msra.mxu0 %v503
        %563 = vmatpush.bf16.msra.mxu0 %v502
        %564 = vmatmul.bf16.gmra.mxu0 %v392
        %v565 = vpop.f32.mrf.mxu0
        %v566 = vadd.f32 %v552, %v565
        %v567 = vpop.f32.mrf.mxu0
        %v568 = vadd.f32 %v554, %v567
        %569 = vdwg.mxu0
        %570 = vmatpush.bf16.msra.mxu0 %v517
        %571 = vmatpush.bf16.msra.mxu0 %v516
        %572 = vmatpush.bf16.msra.mxu0 %v515
        %573 = vmatpush.bf16.msra.mxu0 %v514
        %574 = vmatpush.bf16.msra.mxu0 %v513
        %575 = vmatpush.bf16.msra.mxu0 %v512
        %576 = vmatpush.bf16.msra.mxu0 %v511
        %577 = vmatpush.bf16.msra.mxu0 %v510
        %578 = vmatmul.bf16.gmra.mxu0 %v394
        %v579 = vpop.f32.mrf.mxu0
        %v580 = vadd.f32 %v566, %v579
        %v581 = vpop.f32.mrf.mxu0
        %v582 = vadd.f32 %v568, %v581
        %583 = vdwg.mxu0
        %v584 = vmax.f32 %v580, 0.0
        %v585 = vmax.f32 %v582, 0.0
        %586 = vst [vmem:[#allocation2] sm:$0xf] 0
        %v587 = vpack.c.bf16 %v584, %v584
        %v588 = vpack.c.bf16 %v585, %v585
        %589 = vst [vmem:[#allocation2 + $0x4] sm:$0xf] %v587
        %590 = vst [vmem:[#allocation2 + $0x8] sm:$0xf] %v588
        %v591 = vld [vmem:[#allocation2] sm:$0xf]
        %v592 = vld [vmem:[#allocation2 + $0x4] sm:$0xf]
        %v593 = vld [vmem:[#allocation2 + $0x8] sm:$0xf]
        %v597 = vunpack.c.l.b16 %v591
        %v598 = vunpack.c.l.b16 %v592
        %v599 = vunpack.c.l.b16 %v593
        %v600 = vpack.c.b16 %v598, %v597
        %v601 = vpack.c.b16 %v599, %v599
        %v602 = vrot.slane %v600, 1
        %v603 = vrot.slane %v601, 1
        %v604 = vsel %vm328, %v602, %v603
        %v605 = vpack.c.b16 %v599, %v598
        %v606 = vrot.slane %v605, 6
        %v607 = vld [vmem:[#allocation5] sm:$0xf]
        %v608 = vld [vmem:[#allocation5 + $0x4] sm:$0xf]
        %v609 = vld [vmem:[#allocation5 + $0x8] sm:$0xf]
        %v610 = vld [vmem:[#allocation5 + $0xc] sm:$0xf]
        %v611 = vld [vmem:[#allocation5 + $0x10] sm:$0xf]
        %v612 = vld [vmem:[#allocation5 + $0x14] sm:$0xf]
        %v613 = vld [vmem:[#allocation5 + $0x18] sm:$0xf]
        %v614 = vld [vmem:[#allocation5 + $0x1c] sm:$0xf]
        %v615 = vld [vmem:[#allocation5 + $0x20] sm:$0xf]
        %v616 = vld [vmem:[#allocation5 + $0x24] sm:$0xf]
        %v617 = vld [vmem:[#allocation5 + $0x28] sm:$0xf]
        %v618 = vld [vmem:[#allocation5 + $0x2c] sm:$0xf]
        %v619 = vld [vmem:[#allocation5 + $0x30] sm:$0xf]
        %v620 = vld [vmem:[#allocation5 + $0x34] sm:$0xf]
        %v621 = vld [vmem:[#allocation5 + $0x38] sm:$0xf]
        %v622 = vld [vmem:[#allocation5 + $0x3c] sm:$0xf]
        %v623 = vld [vmem:[#allocation5 + $0x40] sm:$0xf]
        %v624 = vld [vmem:[#allocation5 + $0x44] sm:$0xf]
        %v625 = vld [vmem:[#allocation5 + $0x48] sm:$0xf]
        %v626 = vld [vmem:[#allocation5 + $0x4c] sm:$0xf]
        %v627 = vld [vmem:[#allocation5 + $0x50] sm:$0xf]
        %v628 = vld [vmem:[#allocation5 + $0x54] sm:$0xf]
        %v629 = vld [vmem:[#allocation5 + $0x58] sm:$0xf]
        %v630 = vld [vmem:[#allocation5 + $0x5c] sm:$0xf]
        %v631 = vld [vmem:[#allocation5 + $0x60] sm:$0xf]
        %v632 = vld [vmem:[#allocation5 + $0x64] sm:$0xf]
        %v633 = vld [vmem:[#allocation5 + $0x68] sm:$0xf]
        %v634 = vld [vmem:[#allocation5 + $0x6c] sm:$0xf]
        %v635 = vld [vmem:[#allocation5 + $0x70] sm:$0xf]
        %v636 = vld [vmem:[#allocation5 + $0x74] sm:$0xf]
        %v637 = vld [vmem:[#allocation5 + $0x78] sm:$0xf]
        %v638 = vld [vmem:[#allocation5 + $0x7c] sm:$0xf]
        %v639 = vld [vmem:[#allocation5 + $0x80] sm:$0xf]
        %v640 = vld [vmem:[#allocation5 + $0x84] sm:$0xf]
        %v641 = vld [vmem:[#allocation5 + $0x88] sm:$0xf]
        %v642 = vld [vmem:[#allocation5 + $0x8c] sm:$0xf]
        %v643 = vld [vmem:[#allocation5 + $0x90] sm:$0xf]
        %v644 = vld [vmem:[#allocation5 + $0x94] sm:$0xf]
        %v645 = vld [vmem:[#allocation5 + $0x98] sm:$0xf]
        %v646 = vld [vmem:[#allocation5 + $0x9c] sm:$0xf]
        %v647 = vld [vmem:[#allocation5 + $0xa0] sm:$0xf]
        %v648 = vld [vmem:[#allocation5 + $0xa4] sm:$0xf]
        %v649 = vld [vmem:[#allocation5 + $0xa8] sm:$0xf]
        %v650 = vld [vmem:[#allocation5 + $0xac] sm:$0xf]
        %v651 = vld [vmem:[#allocation5 + $0xb0] sm:$0xf]
        %v652 = vld [vmem:[#allocation5 + $0xb4] sm:$0xf]
        %v653 = vld [vmem:[#allocation5 + $0xb8] sm:$0xf]
        %v654 = vld [vmem:[#allocation5 + $0xbc] sm:$0xf]
        %v655 = vld [vmem:[%s4] sm:$0x1]
        %v657 = vperm.slane %v655, 0
        %v659 = vrot.slane %v600, 2
        %v660 = vrot.slane %v601, 2
        %v661 = vsel %vm386, %v659, %v660
        %v662 = vrot.slane %v604, 2
        %v663 = vrot.slane %v603, 2
        %v664 = vsel %vm386, %v662, %v663
        %v665 = vrot.slane %v606, 2
        %v666 = vsel %vm386, %v665, %v665
        %v718 = vunpack.c.l.b16 %v607
        %v719 = vunpack.c.l.b16 %v608
        %v720 = vunpack.c.l.b16 %v609
        %v721 = vunpack.c.l.b16 %v610
        %v722 = vunpack.c.l.b16 %v611
        %v723 = vunpack.c.l.b16 %v612
        %v724 = vunpack.c.l.b16 %v613
        %v725 = vunpack.c.l.b16 %v614
        %v726 = vunpack.c.l.b16 %v615
        %v727 = vunpack.c.l.b16 %v616
        %v728 = vunpack.c.l.b16 %v617
        %v729 = vunpack.c.l.b16 %v618
        %v730 = vunpack.c.l.b16 %v619
        %v731 = vunpack.c.l.b16 %v620
        %v732 = vunpack.c.l.b16 %v621
        %v733 = vunpack.c.l.b16 %v622
        %v734 = vunpack.c.l.b16 %v623
        %v735 = vunpack.c.l.b16 %v624
        %v736 = vunpack.c.l.b16 %v625
        %v737 = vunpack.c.l.b16 %v626
        %v738 = vunpack.c.l.b16 %v627
        %v739 = vunpack.c.l.b16 %v628
        %v740 = vunpack.c.l.b16 %v629
        %v741 = vunpack.c.l.b16 %v630
        %v742 = vunpack.c.l.b16 %v631
        %v743 = vunpack.c.l.b16 %v632
        %v744 = vunpack.c.l.b16 %v633
        %v745 = vunpack.c.l.b16 %v634
        %v746 = vunpack.c.l.b16 %v635
        %v747 = vunpack.c.l.b16 %v636
        %v748 = vunpack.c.l.b16 %v637
        %v749 = vunpack.c.l.b16 %v638
        %v750 = vunpack.c.l.b16 %v639
        %v751 = vunpack.c.l.b16 %v640
        %v752 = vunpack.c.l.b16 %v641
        %v753 = vunpack.c.l.b16 %v642
        %v754 = vunpack.c.l.b16 %v643
        %v755 = vunpack.c.l.b16 %v644
        %v756 = vunpack.c.l.b16 %v645
        %v757 = vunpack.c.l.b16 %v646
        %v758 = vunpack.c.l.b16 %v647
        %v759 = vunpack.c.l.b16 %v648
        %v760 = vunpack.c.l.b16 %v649
        %v761 = vunpack.c.l.b16 %v650
        %v762 = vunpack.c.l.b16 %v651
        %v763 = vunpack.c.l.b16 %v652
        %v764 = vunpack.c.l.b16 %v653
        %v765 = vunpack.c.l.b16 %v654
        %v766 = vpack.c.b16 %v719, %v718
        %v767 = vpack.c.b16 %v721, %v720
        %v768 = vpack.c.b16 %v723, %v722
        %v769 = vpack.c.b16 %v725, %v724
        %v770 = vpack.c.b16 %v727, %v726
        %v771 = vpack.c.b16 %v729, %v728
        %v772 = vpack.c.b16 %v731, %v730
        %v773 = vpack.c.b16 %v733, %v732
        %v774 = vpack.c.b16 %v735, %v734
        %v775 = vpack.c.b16 %v737, %v736
        %v776 = vpack.c.b16 %v739, %v738
        %v777 = vpack.c.b16 %v741, %v740
        %v778 = vpack.c.b16 %v743, %v742
        %v779 = vpack.c.b16 %v745, %v744
        %v780 = vpack.c.b16 %v747, %v746
        %v781 = vpack.c.b16 %v749, %v748
        %v782 = vpack.c.b16 %v751, %v750
        %v783 = vpack.c.b16 %v753, %v752
        %v784 = vpack.c.b16 %v755, %v754
        %v785 = vpack.c.b16 %v757, %v756
        %v786 = vpack.c.b16 %v759, %v758
        %v787 = vpack.c.b16 %v761, %v760
        %v788 = vpack.c.b16 %v763, %v762
        %v789 = vpack.c.b16 %v765, %v764
        %814 = vmatpush.bf16.msra.mxu0 %v773
        %815 = vmatpush.bf16.msra.mxu0 %v772
        %816 = vmatpush.bf16.msra.mxu0 %v771
        %817 = vmatpush.bf16.msra.mxu0 %v770
        %818 = vmatpush.bf16.msra.mxu0 %v769
        %819 = vmatpush.bf16.msra.mxu0 %v768
        %820 = vmatpush.bf16.msra.mxu0 %v767
        %821 = vmatpush.bf16.msra.mxu0 %v766
        %822 = vmatmul.bf16.gmra.mxu0 %v661
        %v823 = vpop.f32.mrf.mxu0
        %v824 = vadd.f32 %v657, %v823
        %v825 = vpop.f32.mrf.mxu0
        %v826 = vadd.f32 %v657, %v825
        %827 = vdwg.mxu0
        %828 = vmatpush.bf16.msra.mxu0 %v781
        %829 = vmatpush.bf16.msra.mxu0 %v780
        %830 = vmatpush.bf16.msra.mxu0 %v779
        %831 = vmatpush.bf16.msra.mxu0 %v778
        %832 = vmatpush.bf16.msra.mxu0 %v777
        %833 = vmatpush.bf16.msra.mxu0 %v776
        %834 = vmatpush.bf16.msra.mxu0 %v775
        %835 = vmatpush.bf16.msra.mxu0 %v774
        %836 = vmatmul.bf16.gmra.mxu0 %v664
        %v837 = vpop.f32.mrf.mxu0
        %v838 = vadd.f32 %v824, %v837
        %v839 = vpop.f32.mrf.mxu0
        %v840 = vadd.f32 %v826, %v839
        %841 = vdwg.mxu0
        %842 = vmatpush.bf16.msra.mxu0 %v789
        %843 = vmatpush.bf16.msra.mxu0 %v788
        %844 = vmatpush.bf16.msra.mxu0 %v787
        %845 = vmatpush.bf16.msra.mxu0 %v786
        %846 = vmatpush.bf16.msra.mxu0 %v785
        %847 = vmatpush.bf16.msra.mxu0 %v784
        %848 = vmatpush.bf16.msra.mxu0 %v783
        %849 = vmatpush.bf16.msra.mxu0 %v782
        %850 = vmatmul.bf16.gmra.mxu0 %v666
        %v851 = vpop.f32.mrf.mxu0
        %v852 = vadd.f32 %v838, %v851
        %v853 = vpop.f32.mrf.mxu0
        %v854 = vadd.f32 %v840, %v853
        %855 = vdwg.mxu0
        %v856 = vmax.f32 %v852, 0.0
        %v857 = vmax.f32 %v854, 0.0
        %v858 = vpack.c.bf16 %v316, %v315
        %v859 = vld [vmem:[%s5] sm:$0xf]
        %v860 = vld [vmem:[%s5 + $0x4] sm:$0xf]
        %v861 = vld [vmem:[%s5 + $0x8] sm:$0xf]
        %v862 = vld [vmem:[%s5 + $0xc] sm:$0xf]
        %v863 = vld [vmem:[%s5 + $0x10] sm:$0xf]
        %v864 = vld [vmem:[%s5 + $0x14] sm:$0xf]
        %v865 = vld [vmem:[%s5 + $0x18] sm:$0xf]
        %v866 = vld [vmem:[%s5 + $0x1c] sm:$0xf]
        %v867 = vld [vmem:[%s5 + $0x20] sm:$0xf]
        %v868 = vld [vmem:[%s5 + $0x24] sm:$0xf]
        %v869 = vld [vmem:[%s5 + $0x28] sm:$0xf]
        %v870 = vld [vmem:[%s5 + $0x2c] sm:$0xf]
        %v871 = vld [vmem:[%s5 + $0x30] sm:$0xf]
        %v872 = vld [vmem:[%s5 + $0x34] sm:$0xf]
        %v873 = vld [vmem:[%s5 + $0x38] sm:$0xf]
        %v874 = vld [vmem:[%s5 + $0x3c] sm:$0xf]
        %v875 = vld [vmem:[%s6] sm:$0x1]
        %v877 = vperm.slane %v875, 0
        %v895 = vunpack.c.l.b16 %v859
        %v896 = vunpack.c.l.b16 %v860
        %v897 = vunpack.c.l.b16 %v861
        %v898 = vunpack.c.l.b16 %v862
        %v899 = vunpack.c.l.b16 %v863
        %v900 = vunpack.c.l.b16 %v864
        %v901 = vunpack.c.l.b16 %v865
        %v902 = vunpack.c.l.b16 %v866
        %v903 = vunpack.c.l.b16 %v867
        %v904 = vunpack.c.l.b16 %v868
        %v905 = vunpack.c.l.b16 %v869
        %v906 = vunpack.c.l.b16 %v870
        %v907 = vunpack.c.l.b16 %v871
        %v908 = vunpack.c.l.b16 %v872
        %v909 = vunpack.c.l.b16 %v873
        %v910 = vunpack.c.l.b16 %v874
        %v911 = vpack.c.b16 %v896, %v895
        %v912 = vpack.c.b16 %v898, %v897
        %v913 = vpack.c.b16 %v900, %v899
        %v914 = vpack.c.b16 %v902, %v901
        %v915 = vpack.c.b16 %v904, %v903
        %v916 = vpack.c.b16 %v906, %v905
        %v917 = vpack.c.b16 %v908, %v907
        %v918 = vpack.c.b16 %v910, %v909
        %927 = vmatpush.bf16.msra.mxu0 %v918
        %928 = vmatpush.bf16.msra.mxu0 %v917
        %929 = vmatpush.bf16.msra.mxu0 %v916
        %930 = vmatpush.bf16.msra.mxu0 %v915
        %931 = vmatpush.bf16.msra.mxu0 %v914
        %932 = vmatpush.bf16.msra.mxu0 %v913
        %933 = vmatpush.bf16.msra.mxu0 %v912
        %934 = vmatpush.bf16.msra.mxu0 %v911
        %935 = vmatmul.bf16.gmra.mxu0 %v858
        %v936 = vpop.f32.mrf.mxu0
        %v937 = vadd.f32 %v877, %v936
        %v938 = vpop.f32.mrf.mxu0
        %v939 = vadd.f32 %v877, %v938
        %940 = vdwg.mxu0
        %v941 = vadd.f32 %v856, %v937
        %v942 = vadd.f32 %v857, %v939
        %v943 = vmax.f32 %v941, 0.0
        %v944 = vmax.f32 %v942, 0.0
        %945 = vst [vmem:[%s312] sm:$0xff] %v943
        %946 = vst [vmem:[%s312 + $0x8] sm:$0xff] %v944
        %p947 = scmp.lt.s32.totalorder %s20, 1
        %s948 = scalar_select %p947, %s20, 1
        %s949 = smul.addr %s948, 2
        %s950 = smul.addr %s949, 8
        %s951 = scalar_lea.vmem %s7, %s950
        // Predicated region
        $region57: #{temporal_block_forward.1} parent=47 // pred_check
          %p952 = pneg %p190
        $region58: #{temporal_block_forward.1} parent=47 // pred_check_branch
          %954 = sbr.rel (%p952) target = $region60
        $region59: #{temporal_block_forward.1} parent=47 // pred_region
          _
        $region60: #{temporal_block_forward.1} parent=47 // pred_fallthru
          _
      $region48: #{temporal_block_forward.1} parent=5 // pred_fallthru
        _
      %p955 = scmp.le.s32.totalorder 2, %s15
      // Predicated region
      $region61: #{temporal_block_forward.1} parent=5 // pred_check
        %p956 = pneg %p955
      $region62: #{temporal_block_forward.1} parent=5 // pred_check_branch
        %958 = sbr.rel (%p956) target = $region64
      $region63: #{temporal_block_forward.1} parent=5 // pred_region
        %s959 = ssub.s32 %s15, 2
        // Predicated region
        $region65: #{temporal_block_forward.1} parent=63 // pred_check
          %p960 = pneg %p196
        $region66: #{temporal_block_forward.1} parent=63 // pred_check_branch
          %962 = sbr.rel (%p960) target = $region68
        $region67: #{temporal_block_forward.1} parent=63 // pred_region
          %p963 = scmp.lt.s32.totalorder %s21, 1
          %s964 = scalar_select %p963, %s21, 1
          %s965 = smul.addr %s964, 2
          %s966 = smul.addr %s965, 8
          %s967 = scalar_lea.vmem %s7, %s966
        $region68: #{temporal_block_forward.1} parent=63 // pred_fallthru
          _
      $region64: #{temporal_block_forward.1} parent=5 // pred_fallthru
        _
    $region6: #{temporal_block_forward.1} parent=1 // loop_footer
      %s19 = sadd.s32 1, %s15
    $region7: #{temporal_block_forward.1} parent=1 // loop_footer_branch
      %14 = sbr.rel target = $region3
    $region8: #{temporal_block_forward.1} parent=1 // loop_exit
      _
    %968 = vsyncpa [#allocation4], 1
    %s969 = scalar_lea.sflag [#allocation4], 1
    %970 = vsyncpa %s969, 1
    %971 = vsyncpa [#allocation6], 1

</llo_original>
